<compile_context>
chip_gen: v7x
topology: tpu7x:2x2x1
jax: 0.10.0
libtpu: 0.0.40
codegen_flags: <defaults>
</compile_context>

<pallas_src>
import math
import jax
import jax.numpy as jnp
from jax.experimental import pallas as pl
from jax.experimental.pallas import tpu as pltpu

_ACT_DTYPE = jnp.bfloat16   # inter-layer activation / matmul input dtype
_BN_EPS = 1e-5


# ----------------------------------------------------------------------------
# Pallas kernels
# ----------------------------------------------------------------------------
def _make_matmul_bn_kernel(with_residual: bool, with_relu: bool):
    """im2col conv matmul (bf16 x bf16 -> f32 acc) + folded-BN bias +
    optional residual add + optional ReLU. Epilogue in f32, bf16 store."""
    if with_residual:
        def kernel(a_ref, w_ref, b_ref, r_ref, o_ref):
            acc = jnp.dot(a_ref[...], w_ref[...],
                          preferred_element_type=jnp.float32)
            y = acc + b_ref[...]
            y = y + r_ref[...].astype(jnp.float32)
            if with_relu:
                y = jnp.maximum(y, 0.0)
            o_ref[...] = y.astype(o_ref.dtype)
    else:
        def kernel(a_ref, w_ref, b_ref, o_ref):
            acc = jnp.dot(a_ref[...], w_ref[...],
                          preferred_element_type=jnp.float32)
            y = acc + b_ref[...]
            if with_relu:
                y = jnp.maximum(y, 0.0)
            o_ref[...] = y.astype(o_ref.dtype)
    return kernel


def _maxpool9_kernel(s0, s1, s2, s3, s4, s5, s6, s7, s8, o_ref):
    # Elementwise max of nine shifted/strided slabs (pure VPU, lane-dense).
    m = jnp.maximum(s0[...], s1[...])
    m = jnp.maximum(m, s2[...])
    m = jnp.maximum(m, s3[...])
    m = jnp.maximum(m, s4[...])
    m = jnp.maximum(m, s5[...])
    m = jnp.maximum(m, s6[...])
    m = jnp.maximum(m, s7[...])
    m = jnp.maximum(m, s8[...])
    o_ref[...] = m


# ----------------------------------------------------------------------------
# Tiling helpers
# ----------------------------------------------------------------------------
def _round_up(x, m):
    return ((x + m - 1) // m) * m


def _row_tiling(m):
    """(padded_rows, row_tile): tiles are multiples of 16 (bf16 sublane pack),
    up to 512 rows, and the grid gets >=2 steps whenever possible so both v7x
    TensorCores get work (harmless ~0.35us extra on 1-TC chips)."""
    m_pad = _round_up(m, 128)
    tm = 128
    for cand in (512, 384, 256):
        if m_pad % cand == 0:
            tm = cand
            break
    if m_pad // tm == 1:
        tm = max(tm // 2, 16)
    return m_pad, tm


def _pool_row_tiling(m):
    m_pad = _round_up(m, 8)
    for cand in (512, 256, 128, 64, 32, 16, 8):
        if m_pad % cand == 0:
            return m_pad, cand
    return m_pad, 8


# ----------------------------------------------------------------------------
# Glue: im2col patch extraction (pure JAX/XLA slicing; no compute)
# ----------------------------------------------------------------------------
def _im2col(x_nhwc, kh, kw, stride, dilation, padding, pad_value=0.0):
    N, H, W, C = x_nhwc.shape
    xp = jnp.pad(
        x_nhwc,
        ((0, 0), (padding, padding), (padding, padding), (0, 0)),
        constant_values=pad_value,
    )
    Hp, Wp = H + 2 * padding, W + 2 * padding
    OH = (Hp - (dilation * (kh - 1) + 1)) // stride + 1
    OW = (Wp - (dilation * (kw - 1) + 1)) // stride + 1
    taps = []
    for i in range(kh):
        for j in range(kw):
            taps.append(
                xp[:,
                   i * dilation: i * dilation + stride * (OH - 1) + 1: stride,
                   j * dilation: j * dilation + stride * (OW - 1) + 1: stride,
                   :]
            )
    patches = jnp.stack(taps, axis=3)  # [N, OH, OW, kh*kw, C]
    return patches, OH, OW
# TODO(synk): stride-1 dilated convs (layer1/3/4) could skip im2col entirely
# via a per-tap K-reduction grid axis + VMEM f32 accumulator; kept im2col here.


# ----------------------------------------------------------------------------
# Op wrappers (pallas_call plumbing)
# ----------------------------------------------------------------------------
def conv_bn_act(x_nhwc, weight, scale, bias, *, stride, dilation, padding,
                relu=True, residual=None):
    """Conv2d (no bias) + folded eval-mode BatchNorm + optional residual + ReLU."""
    kh, kw, ci, co = weight.shape
    patches, OH, OW = _im2col(x_nhwc.astype(_ACT_DTYPE), kh, kw,
                              stride, dilation, padding)
    N = x_nhwc.shape[0]
    M = N * OH * OW
    K = kh * kw * ci

    A = patches.reshape(M, K)                       # bf16 im2col stream
    m_pad, tm = _row_tiling(M)
    if m_pad != M:
        A = jnp.pad(A, ((0, m_pad - M), (0, 0)))

    # Fold BN scale into the weights (f32), pad co to a lane-dense 128 multiple.
    co_pad = _round_up(co, 128)
    Wm = weight.reshape(K, co) * scale[None, :]
    b = bias
    if co_pad != co:
        Wm = jnp.pad(Wm, ((0, 0), (0, co_pad - co)))
        b = jnp.pad(b, (0, co_pad - co))
    Wm = Wm.astype(_ACT_DTYPE)
    b = b.reshape(1, co_pad).astype(jnp.float32)

    in_specs = [
        pl.BlockSpec((tm, K), lambda i: (i, 0)),
        pl.BlockSpec((K, co_pad), lambda i: (0, 0)),
        pl.BlockSpec((1, co_pad), lambda i: (0, 0)),
    ]
    args = [A, Wm, b]
    if residual is not None:
        R = residual.astype(_ACT_DTYPE).reshape(M, co)
        R = jnp.pad(R, ((0, m_pad - M), (0, co_pad - co)))
        in_specs.append(pl.BlockSpec((tm, co_pad), lambda i: (i, 0)))
        args.append(R)

    out = pl.pallas_call(
        _make_matmul_bn_kernel(residual is not None, relu),
        out_shape=jax.ShapeDtypeStruct((m_pad, co_pad), _ACT_DTYPE),
        grid=(m_pad // tm,),
        in_specs=in_specs,
        out_specs=pl.BlockSpec((tm, co_pad), lambda i: (i, 0)),
        compiler_params=pltpu.CompilerParams(dimension_semantics=("parallel",)),
    )(*args)

    return out[:M, :co].reshape(N, OH, OW, co)


def maxpool_3x3_s2(x_nhwc):
    """MaxPool2d(kernel_size=3, stride=2, padding=1) as one elementwise-max
    Pallas kernel over nine shifted, strided slabs in (rows, W*C) layout."""
    N, H, W, C = x_nhwc.shape
    OH = (H + 2 - 3) // 2 + 1
    OW = (W + 2 - 3) // 2 + 1
    xp = jnp.pad(x_nhwc, ((0, 0), (1, 1), (1, 1), (0, 0)),
                 constant_values=-jnp.inf)

    slabs = []
    for di in range(3):
        for dj in range(3):
            s = xp[:,
                   di: di + 2 * (OH - 1) + 1: 2,
                   dj: dj + 2 * (OW - 1) + 1: 2,
                   :]
            slabs.append(s.reshape(N * OH, OW * C))

    m = N * OH
    lanes = OW * C
    m_pad, tr = _pool_row_tiling(m)
    if m_pad != m:
        slabs = [jnp.pad(s, ((0, m_pad - m), (0, 0))) for s in slabs]

    out = pl.pallas_call(
        _maxpool9_kernel,
        out_shape=jax.ShapeDtypeStruct((m_pad, lanes), x_nhwc.dtype),
        grid=(m_pad // tr,),
        in_specs=[pl.BlockSpec((tr, lanes), lambda i: (i, 0))] * 9,
        out_specs=pl.BlockSpec((tr, lanes), lambda i: (i, 0)),
        compiler_params=pltpu.CompilerParams(dimension_semantics=("parallel",)),
    )(*slabs)
    return out[:m].reshape(N, OH, OW, C)


# ----------------------------------------------------------------------------
# Parameter construction (deterministic, synthetic)
# ----------------------------------------------------------------------------
def _conv_bn_params(key, kh, kw, ci, co):
    kw_, k1, k2, k3, k4 = jax.random.split(key, 5)
    w = jax.random.normal(kw_, (kh, kw, ci, co), jnp.float32) / math.sqrt(kh * kw * ci)
    gamma = 1.0 + 0.1 * jax.random.normal(k1, (co,), jnp.float32)
    beta = 0.1 * jax.random.normal(k2, (co,), jnp.float32)
    mean = 0.1 * jax.random.normal(k3, (co,), jnp.float32)
    var = jnp.abs(jax.random.normal(k4, (co,), jnp.float32)) + 0.5
    scale = gamma / jnp.sqrt(var + _BN_EPS)     # folded eval-mode BN
    bias = beta - mean * scale
    return {"w": w, "scale": scale, "bias": bias}
# TODO(synk): training-mode BatchNorm (batch statistics + running-stat update)
# is not implemented; kernels fold eval-mode BN into per-channel scale/bias.


def init_resnet_dilated_params(key, in_ch=3, widths=(16, 32, 64, 128)):
    keys = jax.random.split(key, 16)
    ki = iter(keys)
    params = {"stem": _conv_bn_params(next(ki), 7, 7, in_ch, widths[0])}

    def make_block(cin, cout, has_ds):
        blk = {
            "conv1": _conv_bn_params(next(ki), 3, 3, cin, cout),
            "conv2": _conv_bn_params(next(ki), 3, 3, cout, cout),
        }
        if has_ds:
            blk["ds"] = _conv_bn_params(next(ki), 1, 1, cin, cout)
        return blk

    params["layer1"] = make_block(widths[0], widths[0], has_ds=False)
    params["layer2"] = make_block(widths[0], widths[1], has_ds=True)
    params["layer3"] = make_block(widths[1], widths[2], has_ds=True)
    params["layer4"] = make_block(widths[2], widths[3], has_ds=True)
    return params


# ----------------------------------------------------------------------------
# Forward pass (matches ResNetDilated.forward, dilate_scale=8, BasicBlock layers)
# ----------------------------------------------------------------------------
def _basic_block(x, p, *, stride, d1, p1, d2, p2):
    """BasicBlock: relu(bn2(conv2(relu(bn1(conv1(x))))) + shortcut(x))."""
    identity = x
    y = conv_bn_act(x, p["conv1"]["w"], p["conv1"]["scale"], p["conv1"]["bias"],
                    stride=stride, dilation=d1, padding=p1, relu=True)
    if "ds" in p:
        identity = conv_bn_act(x, p["ds"]["w"], p["ds"]["scale"], p["ds"]["bias"],
                               stride=stride, dilation=1, padding=0, relu=False)
    y = conv_bn_act(y, p["conv2"]["w"], p["conv2"]["scale"], p["conv2"]["bias"],
                    stride=1, dilation=d2, padding=p2, relu=True,
                    residual=identity)
    return y


def resnet_dilated_forward(params, x_nchw):
    # layout: NCHW -> NHWC (bf16 activations) for the kernels, NCHW f32 out.
    x = jnp.transpose(x_nchw, (0, 2, 3, 1)).astype(_ACT_DTYPE)

    # stem: conv1 (7x7, s2, p3) -> bn1 -> relu1 -> maxpool(3x3, s2, p1)
    s = params["stem"]
    x = conv_bn_act(x, s["w"], s["scale"], s["bias"],
                    stride=2, dilation=1, padding=3, relu=True)
    x = maxpool_3x3_s2(x)

    # layer1: untouched (stride 1, dilation 1)
    x = _basic_block(x, params["layer1"], stride=1, d1=1, p1=1, d2=1, p2=1)
    # layer2: untouched (first conv stride 2)
    x = _basic_block(x, params["layer2"], stride=2, d1=1, p1=1, d2=1, p2=1)
    # layer3: _nostride_dilate(dilate=2): strided 3x3 -> s1,d1,p1; other 3x3 -> d2,p2
    x = _basic_block(x, params["layer3"], stride=1, d1=1, p1=1, d2=2, p2=2)
    # layer4: _nostride_dilate(dilate=4): strided 3x3 -> s1,d2,p2; other 3x3 -> d4,p4
    x = _basic_block(x, params["layer4"], stride=1, d1=2, p1=2, d2=4, p2=4)

    return jnp.transpose(x, (0, 3, 1, 2)).astype(jnp.float32)  # back to NCHW


# ----------------------------------------------------------------------------
if __name__ == "__main__":
    key = jax.random.PRNGKey(0)
    kp, kx = jax.random.split(key)

    params = init_resnet_dilated_params(kp, in_ch=3, widths=(16, 32, 64, 128))
    x = jax.random.normal(kx, (2, 3, 64, 64), jnp.float32)  # NCHW input

    out = resnet_dilated_forward(params, x)
    out = jax.block_until_ready(out)

    # dilate_scale=8 => output stride 8: [2, 128, 8, 8]
    assert out.shape == (2, 128, 8, 8), out.shape
    assert bool(jnp.all(jnp.isfinite(out)))
    print("KERNEL_OK")
</pallas_src>

<mosaic_0001>
module attributes {stable_mosaic.version = 11 : i64} {
  func.func @kernel(%arg0: i32, %arg1: memref<512x147xbf16, #tpu.memory_space<vmem>>, %arg2: memref<147x128xbf16, #tpu.memory_space<vmem>>, %arg3: memref<1x128xf32, #tpu.memory_space<vmem>>, %arg4: memref<512x128xbf16, #tpu.memory_space<vmem>>) attributes {dimension_semantics = [#tpu.dimension_semantics<parallel>], iteration_bounds = array<i64: 4>, scalar_prefetch = 0 : i64, scratch_operands = 0 : i64, tpu.core_type = #tpu.core_type<tc>, window_params = [{transform_indices = @transform_0, window_bounds = array<i64: 512, 147>}, {pipeline_mode = #tpu.pipeline_mode<synchronous>, transform_indices = @transform_1, window_bounds = array<i64: 147, 128>}, {pipeline_mode = #tpu.pipeline_mode<synchronous>, transform_indices = @transform_2, window_bounds = array<i64: 1, 128>}, {transform_indices = @transform_3, window_bounds = array<i64: 512, 128>}]} {
    %c0 = arith.constant 0 : index
    %c0_0 = arith.constant 0 : index
    %0 = vector.load %arg1[%c0, %c0_0] : memref<512x147xbf16, #tpu.memory_space<vmem>>, vector<512x147xbf16>
    %c0_1 = arith.constant 0 : index
    %c0_2 = arith.constant 0 : index
    %1 = vector.load %arg2[%c0_1, %c0_2] : memref<147x128xbf16, #tpu.memory_space<vmem>>, vector<147x128xbf16>
    %cst = arith.constant dense<0.000000e+00> : vector<512x128xf32>
    %2 = tpu.matmul %0, %1, %cst {dimension_numbers = #tpu.dot_dimension_numbers<[1], [0], [0], [1], [0, 0, 1, 1], [], []>} : vector<512x147xbf16>, vector<147x128xbf16>, vector<512x128xf32> -> vector<512x128xf32>
    %c0_3 = arith.constant 0 : index
    %c0_4 = arith.constant 0 : index
    %3 = vector.load %arg3[%c0_3, %c0_4] : memref<1x128xf32, #tpu.memory_space<vmem>>, vector<1x128xf32>
    %4 = vector.broadcast %3 : vector<1x128xf32> to vector<512x128xf32>
    %5 = arith.addf %2, %4 : vector<512x128xf32>
    %cst_5 = arith.constant 0.000000e+00 : f32
    %6 = vector.broadcast %cst_5 : f32 to vector<512x128xf32>
    %7 = arith.maximumf %5, %6 : vector<512x128xf32>
    %8 = arith.truncf %7 : vector<512x128xf32> to vector<512x128xbf16>
    %c0_6 = arith.constant 0 : index
    %c0_7 = arith.constant 0 : index
    %9 = vector.load %arg4[%c0_6, %c0_7] : memref<512x128xbf16, #tpu.memory_space<vmem>>, vector<512x128xbf16>
    tpu.vector_store %arg4[%c0_6, %c0_7], %8 {strides = array<i32>} : memref<512x128xbf16, #tpu.memory_space<vmem>>, vector<512x128xbf16>,
    return
  }
  func.func @transform_0(%arg0: i32) -> (i32, i32) {
    %c0_i32 = arith.constant 0 : i32
    %c0_i32_0 = arith.constant 0 : i32
    return %arg0, %c0_i32 : i32, i32
  }
  func.func @transform_1(%arg0: i32) -> (i32, i32) {
    %c0_i32 = arith.constant 0 : i32
    %c0_i32_0 = arith.constant 0 : i32
    %c0_i32_1 = arith.constant 0 : i32
    return %c0_i32, %c0_i32_0 : i32, i32
  }
  func.func @transform_2(%arg0: i32) -> (i32, i32) {
    %c0_i32 = arith.constant 0 : i32
    %c0_i32_0 = arith.constant 0 : i32
    %c0_i32_1 = arith.constant 0 : i32
    return %c0_i32, %c0_i32_0 : i32, i32
  }
  func.func @transform_3(%arg0: i32) -> (i32, i32) {
    %c0_i32 = arith.constant 0 : i32
    %c0_i32_0 = arith.constant 0 : i32
    return %arg0, %c0_i32 : i32, i32
  }
}

</mosaic_0001>

<llo_original>
// kernel: tpu_custom_call.1
$region0: #{tpu_custom_call.1}
  #allocation0 [shape = 'u32[]', space=smem, size = 0x4, offset = 0x4, fixed_abs, tag = 'smem constant byte address 0x4 - core index']
  #allocation1 [shape = 'u32[144,128]{1,0:T(1,128)}', space=vmem, size = 0x12000, scoped, tag = 'internal scratch']
  %s0 = inlined_call_operand.vmem [shape: bf16[2048,147], index: 0, kind: input, shape index: {}]
  %s1 = inlined_call_operand.vmem [shape: bf16[147,128], index: 1, kind: input, shape index: {}]
  %s2 = inlined_call_operand.vmem [shape: f32[1,128], index: 2, kind: input, shape index: {}]
  %s3 = inlined_call_operand.hbm [shape: bf16[2048,128], index: 3, kind: output, shape index: {}]
  %s4 = sld [smem:[#allocation0]]
  $region45: #{tpu_custom_call.1} parent=0
    _
  %s6 = ssub.s32 1, %s4
  %s7 = scalar_select 0, %s6, %s4
  $region1: #{tpu_custom_call.1} parent=0
    #allocation2 [shape = 'u8[262144]{0}', space=vmem, size = 0x40000, scoped, tag = 'output window, operand 0']
    #allocation3 [shape = 's32[2]{0}', space=sflag, size = 0x8, scoped, tag = 'scoped memory for tpu_custom_call.1']
    %8 = vsyncpa [#allocation3], 0
    %s9 = scalar_lea.sflag [#allocation3], 1
    %10 = vsyncpa %s9, 0
    loop: start=0, step=1, limit=6
    $region2: #{tpu_custom_call.1} parent=1 // loop_pre_header
      _
    $region3: #{tpu_custom_call.1} parent=1 // loop_header
      %s12 = sphi 0, %s16
      %p13 = scmp.ge.s32.totalorder %s12, 6
      %s22 = sphi 0, %s24
      %s25 = sphi 0, %s22
      %s26 = sphi 0, %s25
      %s42 = sphi 0, %s26
      %s46 = sphi 0, %s46
      %s48 = sphi 0, %s46
      %s49 = sphi 0, %s48
      %s63 = sphi 0, %s49
      %s67 = sphi 0, %s67
      %s69 = sphi 0, %s67
      %s70 = sphi 0, %s69
      %s84 = sphi 0, %s70
      %s90 = sphi 0, %s92
      %s93 = sphi 0, %s90
      %s94 = sphi 0, %s93
      %s110 = sphi 0, %s94
    $region4: #{tpu_custom_call.1} parent=1 // loop_header_branch
      %15 = sbr.rel (%p13) target = $region8
    $region5: #{tpu_custom_call.1} parent=1 // loop_body
      %s17 = ssub.s32 %s12, 1
      %s18 = ssub.s32 %s12, 2
      %s19 = sadd.s32 %s12, 1
      %s20 = ssub.s32 %s12, %s19
      %p21 = scmp.eq.s32.totalorder %s20, 0
      %s23 = sadd.s32 %s22, 1
      %s24 = scalar_select %p21, %s22, %s23
      %p27 = pneg %p21
      %p28 = scmp.eq.s32.totalorder %s12, 3
      %p29 = por %p27, %p28
      %p30 = scmp.ne.s32.totalorder %s22, %s25
      %p31 = scmp.eq.s32.totalorder %s12, 0
      %p32 = por %p30, %p31
      %p33 = scmp.ne.s32.totalorder %s22, %s25
      %p34 = scmp.eq.s32.totalorder %s17, 3
      %p35 = por %p33, %p34
      %p36 = scmp.ne.s32.totalorder %s25, %s26
      %p37 = scmp.eq.s32.totalorder %s17, 0
      %p38 = por %p36, %p37
      %p39 = scmp.ne.s32.totalorder %s25, %s26
      %p40 = scmp.eq.s32.totalorder %s18, 3
      %p41 = por %p39, %p40
      %p43 = scmp.ne.s32.totalorder %s26, %s42
      %p44 = scmp.eq.s32.totalorder %s18, 0
      %p45 = por %p43, %p44
      %s47 = sadd.s32 %s46, 1
      %p50 = scmp.eq.s32.totalorder %s12, 3
      %p51 = scmp.ne.s32.totalorder %s46, %s48
      %p52 = scmp.eq.s32.totalorder %s12, 0
      %p53 = por %p51, %p52
      %p54 = scmp.ne.s32.totalorder %s46, %s48
      %p55 = scmp.eq.s32.totalorder %s17, 3
      %p56 = por %p54, %p55
      %p57 = scmp.ne.s32.totalorder %s48, %s49
      %p58 = scmp.eq.s32.totalorder %s17, 0
      %p59 = por %p57, %p58
      %p60 = scmp.ne.s32.totalorder %s48, %s49
      %p61 = scmp.eq.s32.totalorder %s18, 3
      %p62 = por %p60, %p61
      %p64 = scmp.ne.s32.totalorder %s49, %s63
      %p65 = scmp.eq.s32.totalorder %s18, 0
      %p66 = por %p64, %p65
      %s68 = sadd.s32 %s67, 1
      %p71 = scmp.eq.s32.totalorder %s12, 3
      %p72 = scmp.ne.s32.totalorder %s67, %s69
      %p73 = scmp.eq.s32.totalorder %s12, 0
      %p74 = por %p72, %p73
      %p75 = scmp.ne.s32.totalorder %s67, %s69
      %p76 = scmp.eq.s32.totalorder %s17, 3
      %p77 = por %p75, %p76
      %p78 = scmp.ne.s32.totalorder %s69, %s70
      %p79 = scmp.eq.s32.totalorder %s17, 0
      %p80 = por %p78, %p79
      %p81 = scmp.ne.s32.totalorder %s69, %s70
      %p82 = scmp.eq.s32.totalorder %s18, 3
      %p83 = por %p81, %p82
      %p85 = scmp.ne.s32.totalorder %s70, %s84
      %p86 = scmp.eq.s32.totalorder %s18, 0
      %p87 = por %p85, %p86
      %s88 = ssub.s32 %s12, %s19
      %p89 = scmp.eq.s32.totalorder %s88, 0
      %s91 = sadd.s32 %s90, 1
      %s92 = scalar_select %p89, %s90, %s91
      %p95 = pneg %p89
      %p96 = scmp.eq.s32.totalorder %s12, 3
      %p97 = por %p95, %p96
      %p98 = scmp.ne.s32.totalorder %s90, %s93
      %p99 = scmp.eq.s32.totalorder %s12, 0
      %p100 = por %p98, %p99
      %p101 = scmp.ne.s32.totalorder %s90, %s93
      %p102 = scmp.eq.s32.totalorder %s17, 3
      %p103 = por %p101, %p102
      %p104 = scmp.ne.s32.totalorder %s93, %s94
      %p105 = scmp.eq.s32.totalorder %s17, 0
      %p106 = por %p104, %p105
      %p107 = scmp.ne.s32.totalorder %s93, %s94
      %p108 = scmp.eq.s32.totalorder %s18, 3
      %p109 = por %p107, %p108
      %p111 = scmp.ne.s32.totalorder %s94, %s110
      %p112 = scmp.eq.s32.totalorder %s18, 0
      %p113 = por %p111, %p112
      %p114 = scmp.le.s32.totalorder 1, %s12
      %p115 = scmp.lt.s32.totalorder %s12, 5
      %p116 = pnand %p114, %p115
      %p117 = pneg %p116
      // Predicated region
      $region9: #{tpu_custom_call.1} parent=5 // pred_check
        _
      $region10: #{tpu_custom_call.1} parent=5 // pred_check_branch
        %119 = sbr.rel (%p116) target = $region12
      $region11: #{tpu_custom_call.1} parent=5 // pred_region
        %s120 = ssub.s32 %s12, 1
        // Predicated region
        $region13: #{tpu_custom_call.1} parent=11 // pred_check
          %p121 = pneg %p59
        $region14: #{tpu_custom_call.1} parent=11 // pred_check_branch
          %123 = sbr.rel (%p121) target = $region16
        $region15: #{tpu_custom_call.1} parent=11 // pred_region
          _
        $region16: #{tpu_custom_call.1} parent=11 // pred_fallthru
          _
        // Predicated region
        $region17: #{tpu_custom_call.1} parent=11 // pred_check
          %p124 = pneg %p80
        $region18: #{tpu_custom_call.1} parent=11 // pred_check_branch
          %126 = sbr.rel (%p124) target = $region20
        $region19: #{tpu_custom_call.1} parent=11 // pred_region
          _
        $region20: #{tpu_custom_call.1} parent=11 // pred_fallthru
          _
      $region12: #{tpu_custom_call.1} parent=5 // pred_fallthru
        _
      %p127 = scmp.lt.s32.totalorder %s12, 4
      // Predicated region
      $region21: #{tpu_custom_call.1} parent=5 // pred_check
        %p128 = pneg %p127
      $region22: #{tpu_custom_call.1} parent=5 // pred_check_branch
        %130 = sbr.rel (%p128) target = $region24
      $region23: #{tpu_custom_call.1} parent=5 // pred_region
        // Predicated region
        $region25: #{tpu_custom_call.1} parent=23 // pred_check
          %p131 = pneg %p32
        $region26: #{tpu_custom_call.1} parent=23 // pred_check_branch
          %133 = sbr.rel (%p131) target = $region28
        $region27: #{tpu_custom_call.1} parent=23 // pred_region
          %s134 = smul.u32 64, %s12
          %p135 = scmp.lt.s32.totalorder %s134, 255
          %s136 = scalar_select %p135, %s134, 255
          %s137 = smul.addr %s136, 2
          %s138 = smul.addr %s137, 4
          %s139 = scalar_lea.vmem %s0, %s138
          %s140 = smul.u32 64, %s12
        $region28: #{tpu_custom_call.1} parent=23 // pred_fallthru
          _
      $region24: #{tpu_custom_call.1} parent=5 // pred_fallthru
        _
      %p141 = scmp.le.s32.totalorder 1, %s12
      %p142 = scmp.lt.s32.totalorder %s12, 5
      %p143 = pnand %p141, %p142
      %p144 = pneg %p143
      // Predicated region
      $region29: #{tpu_custom_call.1} parent=5 // pred_check
        _
      $region30: #{tpu_custom_call.1} parent=5 // pred_check_branch
        %146 = sbr.rel (%p143) target = $region32
      $region31: #{tpu_custom_call.1} parent=5 // pred_region
        %s147 = ssub.s32 %s12, 1
        %s148 = smul.u32 64, %s17
        %p149 = scmp.lt.s32.totalorder %s148, 255
        %s150 = scalar_select %p149, %s148, 255
        %s151 = smul.addr %s150, 2
        %s152 = smul.addr %s151, 4
        %s153 = scalar_lea.vmem %s0, %s152
        %p154 = pneg %p38
        %p155 = pneg %p35
        %p156 = pneg %p59
        %p157 = pneg %p56
        %p158 = pneg %p80
        %p159 = pneg %p77
        %p160 = pneg %p106
        %p161 = pneg %p103
        %s162 = sand.u32 %s93, 1
        %s163 = scalar_lea.sflag [#allocation3], %s162
        %s164 = sand.u32 %s93, 1
        %s165 = smul.addr %s164, 256
        %s166 = scalar_lea.vmem [#allocation2], %s165
        %s167 = smul.u32 64, %s17
        %p168 = scmp.lt.s32.totalorder %s167, 255
        %s169 = scalar_select %p168, %s167, 255
        %s170 = smul.addr %s169, 2
        %s171 = smul.addr %s170, 4
        %s172 = scalar_lea.vmem %s0, %s171
        %s173 = smul.u32 64, %s17
        %s174 = smul.u32 64, %s17
        %v176 = vld [vmem:[%s172] sm:$0xff]
        %v177 = vld [vmem:[%s172 + $0x8] sm:$0xff]
        %v178 = vld [vmem:[%s172 + $0x10] sm:$0xff]
        %v179 = vld [vmem:[%s172 + $0x18] sm:$0xff]
        %v180 = vld [vmem:[%s172 + $0x20] sm:$0xff]
        %v181 = vld [vmem:[%s172 + $0x28] sm:$0xff]
        %v182 = vld [vmem:[%s172 + $0x30] sm:$0xff]
        %v183 = vld [vmem:[%s172 + $0x38] sm:$0xff]
        %v184 = vld [vmem:[%s172 + $0x40] sm:$0xff]
        %v185 = vld [vmem:[%s172 + $0x48] sm:$0xff]
        %v186 = vld [vmem:[%s172 + $0x50] sm:$0xff]
        %v187 = vld [vmem:[%s172 + $0x58] sm:$0xff]
        %v188 = vld [vmem:[%s172 + $0x60] sm:$0xff]
        %v189 = vld [vmem:[%s172 + $0x68] sm:$0xff]
        %v190 = vld [vmem:[%s172 + $0x70] sm:$0xff]
        %v191 = vld [vmem:[%s172 + $0x78] sm:$0xff]
        %v192 = vld [vmem:[%s172 + $0x80] sm:$0xff]
        %v193 = vld [vmem:[%s172 + $0x88] sm:$0xff]
        %v194 = vld [vmem:[%s172 + $0x90] sm:$0xff]
        %v195 = vld [vmem:[%s172 + $0x98] sm:$0xff]
        %v196 = vld [vmem:[%s172 + $0xa0] sm:$0xff]
        %v197 = vld [vmem:[%s172 + $0xa8] sm:$0xff]
        %v198 = vld [vmem:[%s172 + $0xb0] sm:$0xff]
        %v199 = vld [vmem:[%s172 + $0xb8] sm:$0xff]
        %v200 = vld [vmem:[%s172 + $0xc0] sm:$0xff]
        %v201 = vld [vmem:[%s172 + $0xc8] sm:$0xff]
        %v202 = vld [vmem:[%s172 + $0xd0] sm:$0xff]
        %v203 = vld [vmem:[%s172 + $0xd8] sm:$0xff]
        %v204 = vld [vmem:[%s172 + $0xe0] sm:$0xff]
        %v205 = vld [vmem:[%s172 + $0xe8] sm:$0xff]
        %v206 = vld [vmem:[%s172 + $0xf0] sm:$0xff]
        %v207 = vld [vmem:[%s172 + $0xf8] sm:$0xff]
        %v208 = vld [vmem:[%s172 + $0x100] sm:$0xff]
        %v209 = vld [vmem:[%s172 + $0x108] sm:$0xff]
        %v210 = vld [vmem:[%s172 + $0x110] sm:$0xff]
        %v211 = vld [vmem:[%s172 + $0x118] sm:$0xff]
        %v212 = vld [vmem:[%s172 + $0x120] sm:$0xff]
        %v213 = vld [vmem:[%s172 + $0x128] sm:$0xff]
        %v214 = vld [vmem:[%s172 + $0x130] sm:$0xff]
        %v215 = vld [vmem:[%s172 + $0x138] sm:$0xff]
        %v216 = vld [vmem:[%s172 + $0x140] sm:$0xff]
        %v217 = vld [vmem:[%s172 + $0x148] sm:$0xff]
        %v218 = vld [vmem:[%s172 + $0x150] sm:$0xff]
        %v219 = vld [vmem:[%s172 + $0x158] sm:$0xff]
        %v220 = vld [vmem:[%s172 + $0x160] sm:$0xff]
        %v221 = vld [vmem:[%s172 + $0x168] sm:$0xff]
        %v222 = vld [vmem:[%s172 + $0x170] sm:$0xff]
        %v223 = vld [vmem:[%s172 + $0x178] sm:$0xff]
        %v224 = vld [vmem:[%s172 + $0x180] sm:$0xff]
        %v225 = vld [vmem:[%s172 + $0x188] sm:$0xff]
        %v226 = vld [vmem:[%s172 + $0x190] sm:$0xff]
        %v227 = vld [vmem:[%s172 + $0x198] sm:$0xff]
        %v228 = vld [vmem:[%s172 + $0x1a0] sm:$0xff]
        %v229 = vld [vmem:[%s172 + $0x1a8] sm:$0xff]
        %v230 = vld [vmem:[%s172 + $0x1b0] sm:$0xff]
        %v231 = vld [vmem:[%s172 + $0x1b8] sm:$0xff]
        %v232 = vld [vmem:[%s172 + $0x1c0] sm:$0xff]
        %v233 = vld [vmem:[%s172 + $0x1c8] sm:$0xff]
        %v234 = vld [vmem:[%s172 + $0x1d0] sm:$0xff]
        %v235 = vld [vmem:[%s172 + $0x1d8] sm:$0xff]
        %v236 = vld [vmem:[%s172 + $0x1e0] sm:$0xff]
        %v237 = vld [vmem:[%s172 + $0x1e8] sm:$0xff]
        %v238 = vld [vmem:[%s172 + $0x1f0] sm:$0xff]
        %v239 = vld [vmem:[%s172 + $0x1f8] sm:$0xff]
        %v240 = vld [vmem:[%s1] sm:$0xf]
        %v241 = vld [vmem:[%s1 + $0x4] sm:$0xf]
        %v242 = vld [vmem:[%s1 + $0x8] sm:$0xf]
        %v243 = vld [vmem:[%s1 + $0xc] sm:$0xf]
        %v244 = vld [vmem:[%s1 + $0x10] sm:$0xf]
        %v245 = vld [vmem:[%s1 + $0x14] sm:$0xf]
        %v246 = vld [vmem:[%s1 + $0x18] sm:$0xf]
        %v247 = vld [vmem:[%s1 + $0x1c] sm:$0xf]
        %v248 = vld [vmem:[%s1 + $0x20] sm:$0xf]
        %v249 = vld [vmem:[%s1 + $0x24] sm:$0xf]
        %v250 = vld [vmem:[%s1 + $0x28] sm:$0xf]
        %v251 = vld [vmem:[%s1 + $0x2c] sm:$0xf]
        %v252 = vld [vmem:[%s1 + $0x30] sm:$0xf]
        %v253 = vld [vmem:[%s1 + $0x34] sm:$0xf]
        %v254 = vld [vmem:[%s1 + $0x38] sm:$0xf]
        %v255 = vld [vmem:[%s1 + $0x3c] sm:$0xf]
        %v256 = vld [vmem:[%s1 + $0x40] sm:$0xf]
        %v257 = vld [vmem:[%s1 + $0x44] sm:$0xf]
        %v258 = vld [vmem:[%s1 + $0x48] sm:$0x3]
        %v259 = vld [vmem:[%s2] sm:$0x1]
        %v261 = vlaneseq
        %v262 = vshrl.u32 %v261, 7
        %v263 = vsub.s32 0, %v262
        %v264 = vrot.slane %v259, %v263
        %v330 = vunpack.c.l.b16 %v176
        %v331 = vunpack.c.h.b16 %v176
        %v332 = vunpack.c.l.b16 %v177
        %v333 = vunpack.c.h.b16 %v177
        %v334 = vunpack.c.l.b16 %v178
        %v335 = vunpack.c.h.b16 %v178
        %v336 = vunpack.c.l.b16 %v179
        %v337 = vunpack.c.h.b16 %v179
        %v338 = vunpack.c.l.b16 %v180
        %v339 = vunpack.c.h.b16 %v180
        %v340 = vunpack.c.l.b16 %v181
        %v341 = vunpack.c.h.b16 %v181
        %v342 = vunpack.c.l.b16 %v182
        %v343 = vunpack.c.h.b16 %v182
        %v344 = vunpack.c.l.b16 %v183
        %v345 = vunpack.c.h.b16 %v183
        %v346 = vunpack.c.l.b16 %v184
        %v347 = vunpack.c.h.b16 %v184
        %v348 = vunpack.c.l.b16 %v185
        %v349 = vunpack.c.h.b16 %v185
        %v350 = vunpack.c.l.b16 %v186
        %v351 = vunpack.c.h.b16 %v186
        %v352 = vunpack.c.l.b16 %v187
        %v353 = vunpack.c.h.b16 %v187
        %v354 = vunpack.c.l.b16 %v188
        %v355 = vunpack.c.h.b16 %v188
        %v356 = vunpack.c.l.b16 %v189
        %v357 = vunpack.c.h.b16 %v189
        %v358 = vunpack.c.l.b16 %v190
        %v359 = vunpack.c.h.b16 %v190
        %v360 = vunpack.c.l.b16 %v191
        %v361 = vunpack.c.h.b16 %v191
        %v362 = vunpack.c.l.b16 %v192
        %v363 = vunpack.c.h.b16 %v192
        %v364 = vunpack.c.l.b16 %v193
        %v365 = vunpack.c.h.b16 %v193
        %v366 = vunpack.c.l.b16 %v194
        %v367 = vunpack.c.h.b16 %v194
        %v368 = vunpack.c.l.b16 %v195
        %v369 = vunpack.c.h.b16 %v195
        %v370 = vunpack.c.l.b16 %v196
        %v371 = vunpack.c.h.b16 %v196
        %v372 = vunpack.c.l.b16 %v197
        %v373 = vunpack.c.h.b16 %v197
        %v374 = vunpack.c.l.b16 %v198
        %v375 = vunpack.c.h.b16 %v198
        %v376 = vunpack.c.l.b16 %v199
        %v377 = vunpack.c.h.b16 %v199
        %v378 = vunpack.c.l.b16 %v200
        %v379 = vunpack.c.h.b16 %v200
        %v380 = vunpack.c.l.b16 %v201
        %v381 = vunpack.c.h.b16 %v201
        %v382 = vunpack.c.l.b16 %v202
        %v383 = vunpack.c.h.b16 %v202
        %v384 = vunpack.c.l.b16 %v203
        %v385 = vunpack.c.h.b16 %v203
        %v386 = vunpack.c.l.b16 %v204
        %v387 = vunpack.c.h.b16 %v204
        %v388 = vunpack.c.l.b16 %v205
        %v389 = vunpack.c.h.b16 %v205
        %v390 = vunpack.c.l.b16 %v206
        %v391 = vunpack.c.h.b16 %v206
        %v392 = vunpack.c.l.b16 %v207
        %v393 = vunpack.c.h.b16 %v207
        %v394 = vunpack.c.l.b16 %v208
        %v395 = vunpack.c.h.b16 %v208
        %v396 = vunpack.c.l.b16 %v209
        %v397 = vunpack.c.h.b16 %v209
        %v398 = vunpack.c.l.b16 %v210
        %v399 = vunpack.c.h.b16 %v210
        %v400 = vunpack.c.l.b16 %v211
        %v401 = vunpack.c.h.b16 %v211
        %v402 = vunpack.c.l.b16 %v212
        %v403 = vunpack.c.h.b16 %v212
        %v404 = vunpack.c.l.b16 %v213
        %v405 = vunpack.c.h.b16 %v213
        %v406 = vunpack.c.l.b16 %v214
        %v407 = vunpack.c.h.b16 %v214
        %v408 = vunpack.c.l.b16 %v215
        %v409 = vunpack.c.h.b16 %v215
        %v410 = vunpack.c.l.b16 %v216
        %v411 = vunpack.c.h.b16 %v216
        %v412 = vunpack.c.l.b16 %v217
        %v413 = vunpack.c.h.b16 %v217
        %v414 = vunpack.c.l.b16 %v218
        %v415 = vunpack.c.h.b16 %v218
        %v416 = vunpack.c.l.b16 %v219
        %v417 = vunpack.c.h.b16 %v219
        %v418 = vunpack.c.l.b16 %v220
        %v419 = vunpack.c.h.b16 %v220
        %v420 = vunpack.c.l.b16 %v221
        %v421 = vunpack.c.h.b16 %v221
        %v422 = vunpack.c.l.b16 %v222
        %v423 = vunpack.c.h.b16 %v222
        %v424 = vunpack.c.l.b16 %v223
        %v425 = vunpack.c.h.b16 %v223
        %v426 = vunpack.c.l.b16 %v224
        %v427 = vunpack.c.h.b16 %v224
        %v428 = vunpack.c.l.b16 %v225
        %v429 = vunpack.c.h.b16 %v225
        %v430 = vunpack.c.l.b16 %v226
        %v431 = vunpack.c.h.b16 %v226
        %v432 = vunpack.c.l.b16 %v227
        %v433 = vunpack.c.h.b16 %v227
        %v434 = vunpack.c.l.b16 %v228
        %v435 = vunpack.c.h.b16 %v228
        %v436 = vunpack.c.l.b16 %v229
        %v437 = vunpack.c.h.b16 %v229
        %v438 = vunpack.c.l.b16 %v230
        %v439 = vunpack.c.h.b16 %v230
        %v440 = vunpack.c.l.b16 %v231
        %v441 = vunpack.c.h.b16 %v231
        %v442 = vunpack.c.l.b16 %v232
        %v443 = vunpack.c.h.b16 %v232
        %v444 = vunpack.c.l.b16 %v233
        %v445 = vunpack.c.h.b16 %v233
        %v446 = vunpack.c.l.b16 %v234
        %v447 = vunpack.c.h.b16 %v234
        %v448 = vunpack.c.l.b16 %v235
        %v449 = vunpack.c.h.b16 %v235
        %v450 = vunpack.c.l.b16 %v236
        %v451 = vunpack.c.h.b16 %v236
        %v452 = vunpack.c.l.b16 %v237
        %v453 = vunpack.c.h.b16 %v237
        %v454 = vunpack.c.l.b16 %v238
        %v455 = vunpack.c.h.b16 %v238
        %v456 = vunpack.c.l.b16 %v239
        %v457 = vunpack.c.h.b16 %v239
        %v458 = vpack.c.b16 %v332, %v330
        %v459 = vpack.c.b16 %v333, %v331
        %v460 = vpack.c.b16 %v336, %v334
        %v461 = vpack.c.b16 %v337, %v335
        %v462 = vpack.c.b16 %v340, %v338
        %v463 = vpack.c.b16 %v341, %v339
        %v464 = vpack.c.b16 %v344, %v342
        %v465 = vpack.c.b16 %v345, %v343
        %v466 = vpack.c.b16 %v348, %v346
        %v467 = vpack.c.b16 %v349, %v347
        %v468 = vpack.c.b16 %v352, %v350
        %v469 = vpack.c.b16 %v353, %v351
        %v470 = vpack.c.b16 %v356, %v354
        %v471 = vpack.c.b16 %v357, %v355
        %v472 = vpack.c.b16 %v360, %v358
        %v473 = vpack.c.b16 %v361, %v359
        %v474 = vpack.c.b16 %v364, %v362
        %v475 = vpack.c.b16 %v365, %v363
        %v476 = vpack.c.b16 %v368, %v366
        %v477 = vpack.c.b16 %v369, %v367
        %v478 = vpack.c.b16 %v372, %v370
        %v479 = vpack.c.b16 %v373, %v371
        %v480 = vpack.c.b16 %v376, %v374
        %v481 = vpack.c.b16 %v377, %v375
        %v482 = vpack.c.b16 %v380, %v378
        %v483 = vpack.c.b16 %v381, %v379
        %v484 = vpack.c.b16 %v384, %v382
        %v485 = vpack.c.b16 %v385, %v383
        %v486 = vpack.c.b16 %v388, %v386
        %v487 = vpack.c.b16 %v389, %v387
        %v488 = vpack.c.b16 %v392, %v390
        %v489 = vpack.c.b16 %v393, %v391
        %v490 = vpack.c.b16 %v396, %v394
        %v491 = vpack.c.b16 %v397, %v395
        %v492 = vpack.c.b16 %v400, %v398
        %v493 = vpack.c.b16 %v401, %v399
        %v494 = vpack.c.b16 %v404, %v402
        %v495 = vpack.c.b16 %v405, %v403
        %v496 = vpack.c.b16 %v408, %v406
        %v497 = vpack.c.b16 %v409, %v407
        %v498 = vpack.c.b16 %v412, %v410
        %v499 = vpack.c.b16 %v413, %v411
        %v500 = vpack.c.b16 %v416, %v414
        %v501 = vpack.c.b16 %v417, %v415
        %v502 = vpack.c.b16 %v420, %v418
        %v503 = vpack.c.b16 %v421, %v419
        %v504 = vpack.c.b16 %v424, %v422
        %v505 = vpack.c.b16 %v425, %v423
        %v506 = vpack.c.b16 %v428, %v426
        %v507 = vpack.c.b16 %v429, %v427
        %v508 = vpack.c.b16 %v432, %v430
        %v509 = vpack.c.b16 %v433, %v431
        %v510 = vpack.c.b16 %v436, %v434
        %v511 = vpack.c.b16 %v437, %v435
        %v512 = vpack.c.b16 %v440, %v438
        %v513 = vpack.c.b16 %v441, %v439
        %v514 = vpack.c.b16 %v444, %v442
        %v515 = vpack.c.b16 %v445, %v443
        %v516 = vpack.c.b16 %v448, %v446
        %v517 = vpack.c.b16 %v449, %v447
        %v518 = vpack.c.b16 %v452, %v450
        %v519 = vpack.c.b16 %v453, %v451
        %v520 = vpack.c.b16 %v456, %v454
        %v521 = vpack.c.b16 %v457, %v455
        %v573 = vunpack.c.l.b16 %v240
        %v574 = vunpack.c.l.b16 %v241
        %v575 = vunpack.c.l.b16 %v242
        %v576 = vunpack.c.l.b16 %v243
        %v577 = vunpack.c.l.b16 %v244
        %v578 = vunpack.c.l.b16 %v245
        %v579 = vunpack.c.l.b16 %v246
        %v580 = vunpack.c.l.b16 %v247
        %v581 = vunpack.c.l.b16 %v248
        %v582 = vunpack.c.l.b16 %v249
        %v583 = vunpack.c.l.b16 %v250
        %v584 = vunpack.c.l.b16 %v251
        %v585 = vunpack.c.l.b16 %v252
        %v586 = vunpack.c.l.b16 %v253
        %v587 = vunpack.c.l.b16 %v254
        %v588 = vunpack.c.l.b16 %v255
        %v589 = vunpack.c.l.b16 %v256
        %v590 = vunpack.c.l.b16 %v257
        %v591 = vunpack.c.l.b16 %v258
        %v592 = vpack.c.b16 %v574, %v573
        %v593 = vpack.c.b16 %v576, %v575
        %v594 = vpack.c.b16 %v578, %v577
        %v595 = vpack.c.b16 %v580, %v579
        %v596 = vpack.c.b16 %v582, %v581
        %v597 = vpack.c.b16 %v584, %v583
        %v598 = vpack.c.b16 %v586, %v585
        %v599 = vpack.c.b16 %v588, %v587
        %v600 = vpack.c.b16 %v590, %v589
        %v601 = vpack.c.b16 %v591, %v591
        %vm611 = vcmask 154624
        %v613 = vsel %vm611, %v459, 0
        %v616 = vsel %vm611, %v461, 0
        %v619 = vsel %vm611, %v463, 0
        %v622 = vsel %vm611, %v465, 0
        %v625 = vsel %vm611, %v467, 0
        %v628 = vsel %vm611, %v469, 0
        %v631 = vsel %vm611, %v471, 0
        %v634 = vsel %vm611, %v473, 0
        %v637 = vsel %vm611, %v475, 0
        %v640 = vsel %vm611, %v477, 0
        %v643 = vsel %vm611, %v479, 0
        %v646 = vsel %vm611, %v481, 0
        %v649 = vsel %vm611, %v483, 0
        %v652 = vsel %vm611, %v485, 0
        %v655 = vsel %vm611, %v487, 0
        %v658 = vsel %vm611, %v489, 0
        %v661 = vsel %vm611, %v491, 0
        %v664 = vsel %vm611, %v493, 0
        %v667 = vsel %vm611, %v495, 0
        %v670 = vsel %vm611, %v497, 0
        %v673 = vsel %vm611, %v499, 0
        %v676 = vsel %vm611, %v501, 0
        %v679 = vsel %vm611, %v503, 0
        %v682 = vsel %vm611, %v505, 0
        %v685 = vsel %vm611, %v507, 0
        %v688 = vsel %vm611, %v509, 0
        %v691 = vsel %vm611, %v511, 0
        %v694 = vsel %vm611, %v513, 0
        %v697 = vsel %vm611, %v515, 0
        %v700 = vsel %vm611, %v517, 0
        %v703 = vsel %vm611, %v519, 0
        %v706 = vsel %vm611, %v521, 0
        %vm708 = vcmask 1040384
        %vm709 = vcmask 1041408
        %v710 = vsel %vm708, 4294967295, 65535
        %v711 = vsel %vm709, %v710, 0
        %v713 = vand.u32 %v601, %v711
        %715 = vmatprep.subr.bf16.mxu0 0
        %716 = vmatpush1.bf16.msra.mxu0 %v592
        %717 = vmatprep.subr.bf16.mxu0 0
        %718 = vmatpush1.bf16.msra.mxu0 %v593
        %719 = vmatprep.subr.bf16.mxu0 0
        %720 = vmatpush1.bf16.msra.mxu0 %v594
        %721 = vmatprep.subr.bf16.mxu0 0
        %722 = vmatpush1.bf16.msra.mxu0 %v595
        %723 = vmatprep.subr.bf16.mxu0 0
        %724 = vmatpush1.bf16.msra.mxu0 %v596
        %725 = vmatprep.subr.bf16.mxu0 0
        %726 = vmatpush1.bf16.msra.mxu0 %v597
        %727 = vmatprep.subr.bf16.mxu0 0
        %728 = vmatpush1.bf16.msra.mxu0 %v598
        %729 = vmatprep.subr.bf16.mxu0 0
        %730 = vmatpush1.bf16.msra.mxu0 %v599
        %731 = vmatprep.subr.bf16.mxu0 0
        %732 = vmatpush1.bf16.msra.mxu0 %v600
        %733 = vmatprep.subr.bf16.mxu0 0
        %734 = vmatpush1.bf16.msra.mxu0 %v713
        %735 = vmatprep.subr.bf16.mxu0 0
        %736 = vmatpush1.bf16.msra.mxu0 0
        %737 = vmatprep.subr.bf16.mxu0 0
        %738 = vmatpush1.bf16.msra.mxu0 0
        %739 = vmatprep.subr.bf16.mxu0 0
        %740 = vmatpush1.bf16.msra.mxu0 0
        %741 = vmatprep.subr.bf16.mxu0 0
        %742 = vmatpush1.bf16.msra.mxu0 0
        %743 = vmatprep.subr.bf16.mxu0 0
        %744 = vmatpush1.bf16.msra.mxu0 0
        %745 = vmatprep.subr.bf16.mxu0 0
        %746 = vmatpush1.bf16.msra.mxu0 0
        %747 = vmatprep.mubr.bf16.mxu0 %v613
        %748 = vmatmul.mubr.bf16.gmra.mrb[0].mxu0 %v458
        %v749 = vpop.f32.mrb[0].mxu0
        %v750 = vadd.f32 %v264, %v749
        %v751 = vpop.f32.mrb[0].mxu0
        %v752 = vpop.f32.mrb[0].mxu0
        %v753 = vadd.f32 %v264, %v752
        %v754 = vpop.f32.mrb[0].mxu0
        %755 = vmatprep.mubr.bf16.mxu0 %v616
        %756 = vmatmul.mubr.bf16.gmra.mrb[0].mxu0 %v460
        %v757 = vpop.f32.mrb[0].mxu0
        %v758 = vadd.f32 %v264, %v757
        %v759 = vpop.f32.mrb[0].mxu0
        %v760 = vpop.f32.mrb[0].mxu0
        %v761 = vadd.f32 %v264, %v760
        %v762 = vpop.f32.mrb[0].mxu0
        %763 = vmatprep.mubr.bf16.mxu0 %v619
        %764 = vmatmul.mubr.bf16.gmra.mrb[0].mxu0 %v462
        %v765 = vpop.f32.mrb[0].mxu0
        %v766 = vadd.f32 %v264, %v765
        %v767 = vpop.f32.mrb[0].mxu0
        %v768 = vpop.f32.mrb[0].mxu0
        %v769 = vadd.f32 %v264, %v768
        %v770 = vpop.f32.mrb[0].mxu0
        %771 = vmatprep.mubr.bf16.mxu0 %v622
        %772 = vmatmul.mubr.bf16.gmra.mrb[0].mxu0 %v464
        %v773 = vpop.f32.mrb[0].mxu0
        %v774 = vadd.f32 %v264, %v773
        %v775 = vpop.f32.mrb[0].mxu0
        %v776 = vpop.f32.mrb[0].mxu0
        %v777 = vadd.f32 %v264, %v776
        %v778 = vpop.f32.mrb[0].mxu0
        %779 = vmatprep.mubr.bf16.mxu0 %v625
        %780 = vmatmul.mubr.bf16.gmra.mrb[0].mxu0 %v466
        %v781 = vpop.f32.mrb[0].mxu0
        %v782 = vadd.f32 %v264, %v781
        %v783 = vpop.f32.mrb[0].mxu0
        %v784 = vpop.f32.mrb[0].mxu0
        %v785 = vadd.f32 %v264, %v784
        %v786 = vpop.f32.mrb[0].mxu0
        %787 = vmatprep.mubr.bf16.mxu0 %v628
        %788 = vmatmul.mubr.bf16.gmra.mrb[0].mxu0 %v468
        %v789 = vpop.f32.mrb[0].mxu0
        %v790 = vadd.f32 %v264, %v789
        %v791 = vpop.f32.mrb[0].mxu0
        %v792 = vpop.f32.mrb[0].mxu0
        %v793 = vadd.f32 %v264, %v792
        %v794 = vpop.f32.mrb[0].mxu0
        %795 = vmatprep.mubr.bf16.mxu0 %v631
        %796 = vmatmul.mubr.bf16.gmra.mrb[0].mxu0 %v470
        %v797 = vpop.f32.mrb[0].mxu0
        %v798 = vadd.f32 %v264, %v797
        %v799 = vpop.f32.mrb[0].mxu0
        %v800 = vpop.f32.mrb[0].mxu0
        %v801 = vadd.f32 %v264, %v800
        %v802 = vpop.f32.mrb[0].mxu0
        %803 = vmatprep.mubr.bf16.mxu0 %v634
        %804 = vmatmul.mubr.bf16.gmra.mrb[0].mxu0 %v472
        %v805 = vpop.f32.mrb[0].mxu0
        %v806 = vadd.f32 %v264, %v805
        %v807 = vpop.f32.mrb[0].mxu0
        %v808 = vpop.f32.mrb[0].mxu0
        %v809 = vadd.f32 %v264, %v808
        %v810 = vpop.f32.mrb[0].mxu0
        %811 = vmatprep.mubr.bf16.mxu0 %v637
        %812 = vmatmul.mubr.bf16.gmra.mrb[0].mxu0 %v474
        %v813 = vpop.f32.mrb[0].mxu0
        %v814 = vadd.f32 %v264, %v813
        %v815 = vpop.f32.mrb[0].mxu0
        %v816 = vpop.f32.mrb[0].mxu0
        %v817 = vadd.f32 %v264, %v816
        %v818 = vpop.f32.mrb[0].mxu0
        %819 = vmatprep.mubr.bf16.mxu0 %v640
        %820 = vmatmul.mubr.bf16.gmra.mrb[0].mxu0 %v476
        %v821 = vpop.f32.mrb[0].mxu0
        %v822 = vadd.f32 %v264, %v821
        %v823 = vpop.f32.mrb[0].mxu0
        %v824 = vpop.f32.mrb[0].mxu0
        %v825 = vadd.f32 %v264, %v824
        %v826 = vpop.f32.mrb[0].mxu0
        %827 = vmatprep.mubr.bf16.mxu0 %v643
        %828 = vmatmul.mubr.bf16.gmra.mrb[0].mxu0 %v478
        %v829 = vpop.f32.mrb[0].mxu0
        %v830 = vadd.f32 %v264, %v829
        %v831 = vpop.f32.mrb[0].mxu0
        %v832 = vpop.f32.mrb[0].mxu0
        %v833 = vadd.f32 %v264, %v832
        %v834 = vpop.f32.mrb[0].mxu0
        %835 = vmatprep.mubr.bf16.mxu0 %v646
        %836 = vmatmul.mubr.bf16.gmra.mrb[0].mxu0 %v480
        %v837 = vpop.f32.mrb[0].mxu0
        %v838 = vadd.f32 %v264, %v837
        %v839 = vpop.f32.mrb[0].mxu0
        %v840 = vpop.f32.mrb[0].mxu0
        %v841 = vadd.f32 %v264, %v840
        %v842 = vpop.f32.mrb[0].mxu0
        %843 = vmatprep.mubr.bf16.mxu0 %v649
        %844 = vmatmul.mubr.bf16.gmra.mrb[0].mxu0 %v482
        %v845 = vpop.f32.mrb[0].mxu0
        %v846 = vadd.f32 %v264, %v845
        %v847 = vpop.f32.mrb[0].mxu0
        %v848 = vpop.f32.mrb[0].mxu0
        %v849 = vadd.f32 %v264, %v848
        %v850 = vpop.f32.mrb[0].mxu0
        %851 = vmatprep.mubr.bf16.mxu0 %v652
        %852 = vmatmul.mubr.bf16.gmra.mrb[0].mxu0 %v484
        %v853 = vpop.f32.mrb[0].mxu0
        %v854 = vadd.f32 %v264, %v853
        %v855 = vpop.f32.mrb[0].mxu0
        %v856 = vpop.f32.mrb[0].mxu0
        %v857 = vadd.f32 %v264, %v856
        %v858 = vpop.f32.mrb[0].mxu0
        %859 = vmatprep.mubr.bf16.mxu0 %v655
        %860 = vmatmul.mubr.bf16.gmra.mrb[0].mxu0 %v486
        %v861 = vpop.f32.mrb[0].mxu0
        %v862 = vadd.f32 %v264, %v861
        %v863 = vpop.f32.mrb[0].mxu0
        %v864 = vpop.f32.mrb[0].mxu0
        %v865 = vadd.f32 %v264, %v864
        %v866 = vpop.f32.mrb[0].mxu0
        %867 = vmatprep.mubr.bf16.mxu0 %v658
        %868 = vmatmul.mubr.bf16.gmra.mrb[0].mxu0 %v488
        %v869 = vpop.f32.mrb[0].mxu0
        %v870 = vadd.f32 %v264, %v869
        %v871 = vpop.f32.mrb[0].mxu0
        %v872 = vpop.f32.mrb[0].mxu0
        %v873 = vadd.f32 %v264, %v872
        %v874 = vpop.f32.mrb[0].mxu0
        %875 = vmatprep.mubr.bf16.mxu0 %v661
        %876 = vmatmul.mubr.bf16.gmra.mrb[0].mxu0 %v490
        %v877 = vpop.f32.mrb[0].mxu0
        %v878 = vadd.f32 %v264, %v877
        %v879 = vpop.f32.mrb[0].mxu0
        %v880 = vpop.f32.mrb[0].mxu0
        %v881 = vadd.f32 %v264, %v880
        %v882 = vpop.f32.mrb[0].mxu0
        %883 = vmatprep.mubr.bf16.mxu0 %v664
        %884 = vmatmul.mubr.bf16.gmra.mrb[0].mxu0 %v492
        %v885 = vpop.f32.mrb[0].mxu0
        %v886 = vadd.f32 %v264, %v885
        %v887 = vpop.f32.mrb[0].mxu0
        %v888 = vpop.f32.mrb[0].mxu0
        %v889 = vadd.f32 %v264, %v888
        %v890 = vpop.f32.mrb[0].mxu0
        %891 = vmatprep.mubr.bf16.mxu0 %v667
        %892 = vmatmul.mubr.bf16.gmra.mrb[0].mxu0 %v494
        %v893 = vpop.f32.mrb[0].mxu0
        %v894 = vadd.f32 %v264, %v893
        %v895 = vpop.f32.mrb[0].mxu0
        %v896 = vpop.f32.mrb[0].mxu0
        %v897 = vadd.f32 %v264, %v896
        %v898 = vpop.f32.mrb[0].mxu0
        %899 = vmatprep.mubr.bf16.mxu0 %v670
        %900 = vmatmul.mubr.bf16.gmra.mrb[0].mxu0 %v496
        %v901 = vpop.f32.mrb[0].mxu0
        %v902 = vadd.f32 %v264, %v901
        %v903 = vpop.f32.mrb[0].mxu0
        %v904 = vpop.f32.mrb[0].mxu0
        %v905 = vadd.f32 %v264, %v904
        %v906 = vpop.f32.mrb[0].mxu0
        %907 = vmatprep.mubr.bf16.mxu0 %v673
        %908 = vmatmul.mubr.bf16.gmra.mrb[0].mxu0 %v498
        %v909 = vpop.f32.mrb[0].mxu0
        %v910 = vadd.f32 %v264, %v909
        %v911 = vpop.f32.mrb[0].mxu0
        %v912 = vpop.f32.mrb[0].mxu0
        %v913 = vadd.f32 %v264, %v912
        %v914 = vpop.f32.mrb[0].mxu0
        %915 = vmatprep.mubr.bf16.mxu0 %v676
        %916 = vmatmul.mubr.bf16.gmra.mrb[0].mxu0 %v500
        %v917 = vpop.f32.mrb[0].mxu0
        %v918 = vadd.f32 %v264, %v917
        %v919 = vpop.f32.mrb[0].mxu0
        %v920 = vpop.f32.mrb[0].mxu0
        %v921 = vadd.f32 %v264, %v920
        %v922 = vpop.f32.mrb[0].mxu0
        %923 = vmatprep.mubr.bf16.mxu0 %v679
        %924 = vmatmul.mubr.bf16.gmra.mrb[0].mxu0 %v502
        %v925 = vpop.f32.mrb[0].mxu0
        %v926 = vadd.f32 %v264, %v925
        %v927 = vpop.f32.mrb[0].mxu0
        %v928 = vpop.f32.mrb[0].mxu0
        %v929 = vadd.f32 %v264, %v928
        %v930 = vpop.f32.mrb[0].mxu0
        %931 = vmatprep.mubr.bf16.mxu0 %v682
        %932 = vmatmul.mubr.bf16.gmra.mrb[0].mxu0 %v504
        %v933 = vpop.f32.mrb[0].mxu0
        %v934 = vadd.f32 %v264, %v933
        %v935 = vpop.f32.mrb[0].mxu0
        %v936 = vpop.f32.mrb[0].mxu0
        %v937 = vadd.f32 %v264, %v936
        %v938 = vpop.f32.mrb[0].mxu0
        %939 = vmatprep.mubr.bf16.mxu0 %v685
        %940 = vmatmul.mubr.bf16.gmra.mrb[0].mxu0 %v506
        %v941 = vpop.f32.mrb[0].mxu0
        %v942 = vadd.f32 %v264, %v941
        %v943 = vpop.f32.mrb[0].mxu0
        %v944 = vpop.f32.mrb[0].mxu0
        %v945 = vadd.f32 %v264, %v944
        %v946 = vpop.f32.mrb[0].mxu0
        %947 = vmatprep.mubr.bf16.mxu0 %v688
        %948 = vmatmul.mubr.bf16.gmra.mrb[0].mxu0 %v508
        %v949 = vpop.f32.mrb[0].mxu0
        %v950 = vadd.f32 %v264, %v949
        %v951 = vpop.f32.mrb[0].mxu0
        %v952 = vpop.f32.mrb[0].mxu0
        %v953 = vadd.f32 %v264, %v952
        %v954 = vpop.f32.mrb[0].mxu0
        %955 = vmatprep.mubr.bf16.mxu0 %v691
        %956 = vmatmul.mubr.bf16.gmra.mrb[0].mxu0 %v510
        %v957 = vpop.f32.mrb[0].mxu0
        %v958 = vadd.f32 %v264, %v957
        %v959 = vpop.f32.mrb[0].mxu0
        %v960 = vpop.f32.mrb[0].mxu0
        %v961 = vadd.f32 %v264, %v960
        %v962 = vpop.f32.mrb[0].mxu0
        %963 = vmatprep.mubr.bf16.mxu0 %v694
        %964 = vmatmul.mubr.bf16.gmra.mrb[0].mxu0 %v512
        %v965 = vpop.f32.mrb[0].mxu0
        %v966 = vadd.f32 %v264, %v965
        %v967 = vpop.f32.mrb[0].mxu0
        %v968 = vpop.f32.mrb[0].mxu0
        %v969 = vadd.f32 %v264, %v968
        %v970 = vpop.f32.mrb[0].mxu0
        %971 = vmatprep.mubr.bf16.mxu0 %v697
        %972 = vmatmul.mubr.bf16.gmra.mrb[0].mxu0 %v514
        %v973 = vpop.f32.mrb[0].mxu0
        %v974 = vadd.f32 %v264, %v973
        %v975 = vpop.f32.mrb[0].mxu0
        %v976 = vpop.f32.mrb[0].mxu0
        %v977 = vadd.f32 %v264, %v976
        %v978 = vpop.f32.mrb[0].mxu0
        %979 = vmatprep.mubr.bf16.mxu0 %v700
        %980 = vmatmul.mubr.bf16.gmra.mrb[0].mxu0 %v516
        %v981 = vpop.f32.mrb[0].mxu0
        %v982 = vadd.f32 %v264, %v981
        %v983 = vpop.f32.mrb[0].mxu0
        %v984 = vpop.f32.mrb[0].mxu0
        %v985 = vadd.f32 %v264, %v984
        %v986 = vpop.f32.mrb[0].mxu0
        %987 = vmatprep.mubr.bf16.mxu0 %v703
        %988 = vmatmul.mubr.bf16.gmra.mrb[0].mxu0 %v518
        %v989 = vpop.f32.mrb[0].mxu0
        %v990 = vadd.f32 %v264, %v989
        %v991 = vpop.f32.mrb[0].mxu0
        %v992 = vpop.f32.mrb[0].mxu0
        %v993 = vadd.f32 %v264, %v992
        %v994 = vpop.f32.mrb[0].mxu0
        %995 = vmatprep.mubr.bf16.mxu0 %v706
        %996 = vmatmul.mubr.bf16.gmra.mrb[0].mxu0 %v520
        %v997 = vpop.f32.mrb[0].mxu0
        %v998 = vadd.f32 %v264, %v997
        %v999 = vpop.f32.mrb[0].mxu0
        %v1000 = vpop.f32.mrb[0].mxu0
        %v1001 = vadd.f32 %v264, %v1000
        %v1002 = vpop.f32.mrb[0].mxu0
        %1003 = vdwg.mxu0
        %v1004 = vmax.f32 %v750, 0.0
        %v1005 = vmax.f32 %v753, 0.0
        %v1006 = vmax.f32 %v758, 0.0
        %v1007 = vmax.f32 %v761, 0.0
        %v1008 = vmax.f32 %v766, 0.0
        %v1009 = vmax.f32 %v769, 0.0
        %v1010 = vmax.f32 %v774, 0.0
        %v1011 = vmax.f32 %v777, 0.0
        %v1012 = vmax.f32 %v782, 0.0
        %v1013 = vmax.f32 %v785, 0.0
        %v1014 = vmax.f32 %v790, 0.0
        %v1015 = vmax.f32 %v793, 0.0
        %v1016 = vmax.f32 %v798, 0.0
        %v1017 = vmax.f32 %v801, 0.0
        %v1018 = vmax.f32 %v806, 0.0
        %v1019 = vmax.f32 %v809, 0.0
        %v1020 = vmax.f32 %v814, 0.0
        %v1021 = vmax.f32 %v817, 0.0
        %v1022 = vmax.f32 %v822, 0.0
        %v1023 = vmax.f32 %v825, 0.0
        %v1024 = vmax.f32 %v830, 0.0
        %v1025 = vmax.f32 %v833, 0.0
        %v1026 = vmax.f32 %v838, 0.0
        %v1027 = vmax.f32 %v841, 0.0
        %v1028 = vmax.f32 %v846, 0.0
        %v1029 = vmax.f32 %v849, 0.0
        %v1030 = vmax.f32 %v854, 0.0
        %v1031 = vmax.f32 %v857, 0.0
        %v1032 = vmax.f32 %v862, 0.0
        %v1033 = vmax.f32 %v865, 0.0
        %v1034 = vmax.f32 %v870, 0.0
        %v1035 = vmax.f32 %v873, 0.0
        %v1036 = vmax.f32 %v878, 0.0
        %v1037 = vmax.f32 %v881, 0.0
        %v1038 = vmax.f32 %v886, 0.0
        %v1039 = vmax.f32 %v889, 0.0
        %v1040 = vmax.f32 %v894, 0.0
        %v1041 = vmax.f32 %v897, 0.0
        %v1042 = vmax.f32 %v902, 0.0
        %v1043 = vmax.f32 %v905, 0.0
        %v1044 = vmax.f32 %v910, 0.0
        %v1045 = vmax.f32 %v913, 0.0
        %v1046 = vmax.f32 %v918, 0.0
        %v1047 = vmax.f32 %v921, 0.0
        %v1048 = vmax.f32 %v926, 0.0
        %v1049 = vmax.f32 %v929, 0.0
        %v1050 = vmax.f32 %v934, 0.0
        %v1051 = vmax.f32 %v937, 0.0
        %v1052 = vmax.f32 %v942, 0.0
        %v1053 = vmax.f32 %v945, 0.0
        %v1054 = vmax.f32 %v950, 0.0
        %v1055 = vmax.f32 %v953, 0.0
        %v1056 = vmax.f32 %v958, 0.0
        %v1057 = vmax.f32 %v961, 0.0
        %v1058 = vmax.f32 %v966, 0.0
        %v1059 = vmax.f32 %v969, 0.0
        %v1060 = vmax.f32 %v974, 0.0
        %v1061 = vmax.f32 %v977, 0.0
        %v1062 = vmax.f32 %v982, 0.0
        %v1063 = vmax.f32 %v985, 0.0
        %v1064 = vmax.f32 %v990, 0.0
        %v1065 = vmax.f32 %v993, 0.0
        %v1066 = vmax.f32 %v998, 0.0
        %v1067 = vmax.f32 %v1001, 0.0
        %v1068 = vpack.c.bf16 %v1005, %v1004
        %v1069 = vpack.c.bf16 %v1007, %v1006
        %v1070 = vpack.c.bf16 %v1009, %v1008
        %v1071 = vpack.c.bf16 %v1011, %v1010
        %v1072 = vpack.c.bf16 %v1013, %v1012
        %v1073 = vpack.c.bf16 %v1015, %v1014
        %v1074 = vpack.c.bf16 %v1017, %v1016
        %v1075 = vpack.c.bf16 %v1019, %v1018
        %v1076 = vpack.c.bf16 %v1021, %v1020
        %v1077 = vpack.c.bf16 %v1023, %v1022
        %v1078 = vpack.c.bf16 %v1025, %v1024
        %v1079 = vpack.c.bf16 %v1027, %v1026
        %v1080 = vpack.c.bf16 %v1029, %v1028
        %v1081 = vpack.c.bf16 %v1031, %v1030
        %v1082 = vpack.c.bf16 %v1033, %v1032
        %v1083 = vpack.c.bf16 %v1035, %v1034
        %v1084 = vpack.c.bf16 %v1037, %v1036
        %v1085 = vpack.c.bf16 %v1039, %v1038
        %v1086 = vpack.c.bf16 %v1041, %v1040
        %v1087 = vpack.c.bf16 %v1043, %v1042
        %v1088 = vpack.c.bf16 %v1045, %v1044
        %v1089 = vpack.c.bf16 %v1047, %v1046
        %v1090 = vpack.c.bf16 %v1049, %v1048
        %v1091 = vpack.c.bf16 %v1051, %v1050
        %v1092 = vpack.c.bf16 %v1053, %v1052
        %v1093 = vpack.c.bf16 %v1055, %v1054
        %v1094 = vpack.c.bf16 %v1057, %v1056
        %v1095 = vpack.c.bf16 %v1059, %v1058
        %v1096 = vpack.c.bf16 %v1061, %v1060
        %v1097 = vpack.c.bf16 %v1063, %v1062
        %v1098 = vpack.c.bf16 %v1065, %v1064
        %v1099 = vpack.c.bf16 %v1067, %v1066
        %v1132 = vunpack.c.l.b16 %v1068
        %v1133 = vunpack.c.h.b16 %v1068
        %v1134 = vunpack.c.l.b16 %v1069
        %v1135 = vunpack.c.h.b16 %v1069
        %v1136 = vunpack.c.l.b16 %v1070
        %v1137 = vunpack.c.h.b16 %v1070
        %v1138 = vunpack.c.l.b16 %v1071
        %v1139 = vunpack.c.h.b16 %v1071
        %v1140 = vunpack.c.l.b16 %v1072
        %v1141 = vunpack.c.h.b16 %v1072
        %v1142 = vunpack.c.l.b16 %v1073
        %v1143 = vunpack.c.h.b16 %v1073
        %v1144 = vunpack.c.l.b16 %v1074
        %v1145 = vunpack.c.h.b16 %v1074
        %v1146 = vunpack.c.l.b16 %v1075
        %v1147 = vunpack.c.h.b16 %v1075
        %v1148 = vunpack.c.l.b16 %v1076
        %v1149 = vunpack.c.h.b16 %v1076
        %v1150 = vunpack.c.l.b16 %v1077
        %v1151 = vunpack.c.h.b16 %v1077
        %v1152 = vunpack.c.l.b16 %v1078
        %v1153 = vunpack.c.h.b16 %v1078
        %v1154 = vunpack.c.l.b16 %v1079
        %v1155 = vunpack.c.h.b16 %v1079
        %v1156 = vunpack.c.l.b16 %v1080
        %v1157 = vunpack.c.h.b16 %v1080
        %v1158 = vunpack.c.l.b16 %v1081
        %v1159 = vunpack.c.h.b16 %v1081
        %v1160 = vunpack.c.l.b16 %v1082
        %v1161 = vunpack.c.h.b16 %v1082
        %v1162 = vunpack.c.l.b16 %v1083
        %v1163 = vunpack.c.h.b16 %v1083
        %v1164 = vunpack.c.l.b16 %v1084
        %v1165 = vunpack.c.h.b16 %v1084
        %v1166 = vunpack.c.l.b16 %v1085
        %v1167 = vunpack.c.h.b16 %v1085
        %v1168 = vunpack.c.l.b16 %v1086
        %v1169 = vunpack.c.h.b16 %v1086
        %v1170 = vunpack.c.l.b16 %v1087
        %v1171 = vunpack.c.h.b16 %v1087
        %v1172 = vunpack.c.l.b16 %v1088
        %v1173 = vunpack.c.h.b16 %v1088
        %v1174 = vunpack.c.l.b16 %v1089
        %v1175 = vunpack.c.h.b16 %v1089
        %v1176 = vunpack.c.l.b16 %v1090
        %v1177 = vunpack.c.h.b16 %v1090
        %v1178 = vunpack.c.l.b16 %v1091
        %v1179 = vunpack.c.h.b16 %v1091
        %v1180 = vunpack.c.l.b16 %v1092
        %v1181 = vunpack.c.h.b16 %v1092
        %v1182 = vunpack.c.l.b16 %v1093
        %v1183 = vunpack.c.h.b16 %v1093
        %v1184 = vunpack.c.l.b16 %v1094
        %v1185 = vunpack.c.h.b16 %v1094
        %v1186 = vunpack.c.l.b16 %v1095
        %v1187 = vunpack.c.h.b16 %v1095
        %v1188 = vunpack.c.l.b16 %v1096
        %v1189 = vunpack.c.h.b16 %v1096
        %v1190 = vunpack.c.l.b16 %v1097
        %v1191 = vunpack.c.h.b16 %v1097
        %v1192 = vunpack.c.l.b16 %v1098
        %v1193 = vunpack.c.h.b16 %v1098
        %v1194 = vunpack.c.l.b16 %v1099
        %v1195 = vunpack.c.h.b16 %v1099
        %v1196 = vpack.c.b16 %v1132, %v1132
        %v1197 = vpack.c.b16 %v1133, %v1133
        %v1198 = vpack.c.b16 %v1134, %v1134
        %v1199 = vpack.c.b16 %v1135, %v1135
        %v1200 = vpack.c.b16 %v1136, %v1136
        %v1201 = vpack.c.b16 %v1137, %v1137
        %v1202 = vpack.c.b16 %v1138, %v1138
        %v1203 = vpack.c.b16 %v1139, %v1139
        %v1204 = vpack.c.b16 %v1140, %v1140
        %v1205 = vpack.c.b16 %v1141, %v1141
        %v1206 = vpack.c.b16 %v1142, %v1142
        %v1207 = vpack.c.b16 %v1143, %v1143
        %v1208 = vpack.c.b16 %v1144, %v1144
        %v1209 = vpack.c.b16 %v1145, %v1145
        %v1210 = vpack.c.b16 %v1146, %v1146
        %v1211 = vpack.c.b16 %v1147, %v1147
        %v1212 = vpack.c.b16 %v1148, %v1148
        %v1213 = vpack.c.b16 %v1149, %v1149
        %v1214 = vpack.c.b16 %v1150, %v1150
        %v1215 = vpack.c.b16 %v1151, %v1151
        %v1216 = vpack.c.b16 %v1152, %v1152
        %v1217 = vpack.c.b16 %v1153, %v1153
        %v1218 = vpack.c.b16 %v1154, %v1154
        %v1219 = vpack.c.b16 %v1155, %v1155
        %v1220 = vpack.c.b16 %v1156, %v1156
        %v1221 = vpack.c.b16 %v1157, %v1157
        %v1222 = vpack.c.b16 %v1158, %v1158
        %v1223 = vpack.c.b16 %v1159, %v1159
        %v1224 = vpack.c.b16 %v1160, %v1160
        %v1225 = vpack.c.b16 %v1161, %v1161
        %v1226 = vpack.c.b16 %v1162, %v1162
        %v1227 = vpack.c.b16 %v1163, %v1163
        %v1228 = vpack.c.b16 %v1164, %v1164
        %v1229 = vpack.c.b16 %v1165, %v1165
        %v1230 = vpack.c.b16 %v1166, %v1166
        %v1231 = vpack.c.b16 %v1167, %v1167
        %v1232 = vpack.c.b16 %v1168, %v1168
        %v1233 = vpack.c.b16 %v1169, %v1169
        %v1234 = vpack.c.b16 %v1170, %v1170
        %v1235 = vpack.c.b16 %v1171, %v1171
        %v1236 = vpack.c.b16 %v1172, %v1172
        %v1237 = vpack.c.b16 %v1173, %v1173
        %v1238 = vpack.c.b16 %v1174, %v1174
        %v1239 = vpack.c.b16 %v1175, %v1175
        %v1240 = vpack.c.b16 %v1176, %v1176
        %v1241 = vpack.c.b16 %v1177, %v1177
        %v1242 = vpack.c.b16 %v1178, %v1178
        %v1243 = vpack.c.b16 %v1179, %v1179
        %v1244 = vpack.c.b16 %v1180, %v1180
        %v1245 = vpack.c.b16 %v1181, %v1181
        %v1246 = vpack.c.b16 %v1182, %v1182
        %v1247 = vpack.c.b16 %v1183, %v1183
        %v1248 = vpack.c.b16 %v1184, %v1184
        %v1249 = vpack.c.b16 %v1185, %v1185
        %v1250 = vpack.c.b16 %v1186, %v1186
        %v1251 = vpack.c.b16 %v1187, %v1187
        %v1252 = vpack.c.b16 %v1188, %v1188
        %v1253 = vpack.c.b16 %v1189, %v1189
        %v1254 = vpack.c.b16 %v1190, %v1190
        %v1255 = vpack.c.b16 %v1191, %v1191
        %v1256 = vpack.c.b16 %v1192, %v1192
        %v1257 = vpack.c.b16 %v1193, %v1193
        %v1258 = vpack.c.b16 %v1194, %v1194
        %v1259 = vpack.c.b16 %v1195, %v1195
        %1324 = vst [vmem:[%s166] sm:$0xf] %v1196
        %1325 = vst [vmem:[%s166 + $0x4] sm:$0xf] %v1197
        %1326 = vst [vmem:[%s166 + $0x8] sm:$0xf] %v1198
        %1327 = vst [vmem:[%s166 + $0xc] sm:$0xf] %v1199
        %1328 = vst [vmem:[%s166 + $0x10] sm:$0xf] %v1200
        %1329 = vst [vmem:[%s166 + $0x14] sm:$0xf] %v1201
        %1330 = vst [vmem:[%s166 + $0x18] sm:$0xf] %v1202
        %1331 = vst [vmem:[%s166 + $0x1c] sm:$0xf] %v1203
        %1332 = vst [vmem:[%s166 + $0x20] sm:$0xf] %v1204
        %1333 = vst [vmem:[%s166 + $0x24] sm:$0xf] %v1205
        %1334 = vst [vmem:[%s166 + $0x28] sm:$0xf] %v1206
        %1335 = vst [vmem:[%s166 + $0x2c] sm:$0xf] %v1207
        %1336 = vst [vmem:[%s166 + $0x30] sm:$0xf] %v1208
        %1337 = vst [vmem:[%s166 + $0x34] sm:$0xf] %v1209
        %1338 = vst [vmem:[%s166 + $0x38] sm:$0xf] %v1210
        %1339 = vst [vmem:[%s166 + $0x3c] sm:$0xf] %v1211
        %1340 = vst [vmem:[%s166 + $0x40] sm:$0xf] %v1212
        %1341 = vst [vmem:[%s166 + $0x44] sm:$0xf] %v1213
        %1342 = vst [vmem:[%s166 + $0x48] sm:$0xf] %v1214
        %1343 = vst [vmem:[%s166 + $0x4c] sm:$0xf] %v1215
        %1344 = vst [vmem:[%s166 + $0x50] sm:$0xf] %v1216
        %1345 = vst [vmem:[%s166 + $0x54] sm:$0xf] %v1217
        %1346 = vst [vmem:[%s166 + $0x58] sm:$0xf] %v1218
        %1347 = vst [vmem:[%s166 + $0x5c] sm:$0xf] %v1219
        %1348 = vst [vmem:[%s166 + $0x60] sm:$0xf] %v1220
        %1349 = vst [vmem:[%s166 + $0x64] sm:$0xf] %v1221
        %1350 = vst [vmem:[%s166 + $0x68] sm:$0xf] %v1222
        %1351 = vst [vmem:[%s166 + $0x6c] sm:$0xf] %v1223
        %1352 = vst [vmem:[%s166 + $0x70] sm:$0xf] %v1224
        %1353 = vst [vmem:[%s166 + $0x74] sm:$0xf] %v1225
        %1354 = vst [vmem:[%s166 + $0x78] sm:$0xf] %v1226
        %1355 = vst [vmem:[%s166 + $0x7c] sm:$0xf] %v1227
        %1356 = vst [vmem:[%s166 + $0x80] sm:$0xf] %v1228
        %1357 = vst [vmem:[%s166 + $0x84] sm:$0xf] %v1229
        %1358 = vst [vmem:[%s166 + $0x88] sm:$0xf] %v1230
        %1359 = vst [vmem:[%s166 + $0x8c] sm:$0xf] %v1231
        %1360 = vst [vmem:[%s166 + $0x90] sm:$0xf] %v1232
        %1361 = vst [vmem:[%s166 + $0x94] sm:$0xf] %v1233
        %1362 = vst [vmem:[%s166 + $0x98] sm:$0xf] %v1234
        %1363 = vst [vmem:[%s166 + $0x9c] sm:$0xf] %v1235
        %1364 = vst [vmem:[%s166 + $0xa0] sm:$0xf] %v1236
        %1365 = vst [vmem:[%s166 + $0xa4] sm:$0xf] %v1237
        %1366 = vst [vmem:[%s166 + $0xa8] sm:$0xf] %v1238
        %1367 = vst [vmem:[%s166 + $0xac] sm:$0xf] %v1239
        %1368 = vst [vmem:[%s166 + $0xb0] sm:$0xf] %v1240
        %1369 = vst [vmem:[%s166 + $0xb4] sm:$0xf] %v1241
        %1370 = vst [vmem:[%s166 + $0xb8] sm:$0xf] %v1242
        %1371 = vst [vmem:[%s166 + $0xbc] sm:$0xf] %v1243
        %1372 = vst [vmem:[%s166 + $0xc0] sm:$0xf] %v1244
        %1373 = vst [vmem:[%s166 + $0xc4] sm:$0xf] %v1245
        %1374 = vst [vmem:[%s166 + $0xc8] sm:$0xf] %v1246
        %1375 = vst [vmem:[%s166 + $0xcc] sm:$0xf] %v1247
        %1376 = vst [vmem:[%s166 + $0xd0] sm:$0xf] %v1248
        %1377 = vst [vmem:[%s166 + $0xd4] sm:$0xf] %v1249
        %1378 = vst [vmem:[%s166 + $0xd8] sm:$0xf] %v1250
        %1379 = vst [vmem:[%s166 + $0xdc] sm:$0xf] %v1251
        %1380 = vst [vmem:[%s166 + $0xe0] sm:$0xf] %v1252
        %1381 = vst [vmem:[%s166 + $0xe4] sm:$0xf] %v1253
        %1382 = vst [vmem:[%s166 + $0xe8] sm:$0xf] %v1254
        %1383 = vst [vmem:[%s166 + $0xec] sm:$0xf] %v1255
        %1384 = vst [vmem:[%s166 + $0xf0] sm:$0xf] %v1256
        %1385 = vst [vmem:[%s166 + $0xf4] sm:$0xf] %v1257
        %1386 = vst [vmem:[%s166 + $0xf8] sm:$0xf] %v1258
        %1387 = vst [vmem:[%s166 + $0xfc] sm:$0xf] %v1259
        %s1388 = sand.u32 %s93, 1
        %s1389 = scalar_lea.sflag [#allocation3], %s1388
        %s1390 = sand.u32 %s93, 1
        %s1391 = smul.addr %s1390, 256
        %s1392 = scalar_lea.vmem [#allocation2], %s1391
        // Predicated region
        $region33: #{tpu_custom_call.1} parent=31 // pred_check
          %p1393 = pneg %p103
        $region34: #{tpu_custom_call.1} parent=31 // pred_check_branch
          %1395 = sbr.rel (%p1393) target = $region36
        $region35: #{tpu_custom_call.1} parent=31 // pred_region
          %s1396 = smul.u32 64, %s17
          %s1398 = ssub.s32 4096, 4096
          %1399 = vsyncadd %s1389, %s1398
          %s1400 = smul.addr %s1396, 64
          %s1401 = scalar_lea.hbm %s3, %s1400
          %s1402 = sshll.u32 %s1392, 4
          %s1403 = int_to_ptr.vmem [resolvable:$true] %s1402
          %1408 = dma.vmem_to_hbm [thread:$0]  %s1403, 4096, %s1401, %s1389, 64, 64, 4
        $region36: #{tpu_custom_call.1} parent=31 // pred_fallthru
          _
      $region32: #{tpu_custom_call.1} parent=5 // pred_fallthru
        _
      %p1409 = scmp.le.s32.totalorder 2, %s12
      // Predicated region
      $region37: #{tpu_custom_call.1} parent=5 // pred_check
        %p1410 = pneg %p1409
      $region38: #{tpu_custom_call.1} parent=5 // pred_check_branch
        %1412 = sbr.rel (%p1410) target = $region40
      $region39: #{tpu_custom_call.1} parent=5 // pred_region
        %s1413 = ssub.s32 %s12, 2
        // Predicated region
        $region41: #{tpu_custom_call.1} parent=39 // pred_check
          %p1414 = pneg %p109
        $region42: #{tpu_custom_call.1} parent=39 // pred_check_branch
          %1416 = sbr.rel (%p1414) target = $region44
        $region43: #{tpu_custom_call.1} parent=39 // pred_region
          %s1417 = sand.u32 %s94, 1
          %s1418 = scalar_lea.sflag [#allocation3], %s1417
          %s1419 = sand.u32 %s94, 1
          %s1420 = smul.addr %s1419, 256
          %s1421 = scalar_lea.vmem [#allocation2], %s1420
          %1422 = dma.done %s1418, 4096
        $region44: #{tpu_custom_call.1} parent=39 // pred_fallthru
          _
      $region40: #{tpu_custom_call.1} parent=5 // pred_fallthru
        _
    $region6: #{tpu_custom_call.1} parent=1 // loop_footer
      %s16 = sadd.s32 1, %s12
    $region7: #{tpu_custom_call.1} parent=1 // loop_footer_branch
      %11 = sbr.rel target = $region3
    $region8: #{tpu_custom_call.1} parent=1 // loop_exit
      _
    %1423 = vsyncpa [#allocation3], 1
    %s1424 = scalar_lea.sflag [#allocation3], 1
    %1425 = vsyncpa %s1424, 1

</llo_original>
